<compile_context>
chip_gen: v7x
topology: tpu7x:2x2x1
jax: 0.10.0
libtpu: 0.0.40
codegen_flags: <defaults>
</compile_context>

<pallas_src>
import functools
import math

import jax
import jax.numpy as jnp
from jax.experimental import pallas as pl
from jax.experimental.pallas import tpu as pltpu


# ----------------------------------------------------------------------------
# Tiling helpers / constants
# ----------------------------------------------------------------------------

TILE_M = 256            # rows (sublane axis)      — multiple of 8
TILE_N = 512            # matmul output columns    — multiple of 128
TILE_K = 512            # matmul contraction       — multiple of 128
TILE_F = 512            # ffn intermediate chunk   — multiple of 128
TILE_Q = 256            # attention query rows
TILE_KV = 512           # attention key/value rows
TILE_S = 512            # rope sequence rows
VMEM_LIMIT = 64 * 1024 * 1024


def _tile(dim, target, mult):
    """Block size for `dim`: full dim if small, else the largest divisor of
    `dim` that is a multiple of `mult` and <= target (falls back to full)."""
    if dim <= target:
        return dim
    t = (min(target, dim) // mult) * mult
    while t >= mult:
        if dim % t == 0:
            return t
        t -= mult
    return dim


# ----------------------------------------------------------------------------
# Fused RMSNorm + Linear (q/k/v projections, final norm + lm_head)
# ----------------------------------------------------------------------------

def _rmsnorm_linear_kernel(x_ref, g_ref, w_ref, o_ref, *, eps):
    x = x_ref[...].astype(jnp.float32)                        # (bm, D)
    var = jnp.mean(x * x, axis=-1, keepdims=True)
    xn = (x * jax.lax.rsqrt(var + eps)) * g_ref[...].astype(jnp.float32)
    o_ref[...] = jnp.dot(xn.astype(w_ref.dtype), w_ref[...],
                         preferred_element_type=jnp.float32).astype(o_ref.dtype)


def rmsnorm_linear(x2d, gamma, w, eps, out_dtype=jnp.float32):
    m, d = x2d.shape
    n = w.shape[1]
    bm = _tile(m, TILE_M, 8)
    bn = _tile(n, TILE_N, 128)
    return pl.pallas_call(
        functools.partial(_rmsnorm_linear_kernel, eps=eps),
        out_shape=jax.ShapeDtypeStruct((m, n), out_dtype),
        grid=(m // bm, n // bn),
        in_specs=[pl.BlockSpec((bm, d), lambda i, j: (i, 0)),
                  pl.BlockSpec((1, d), lambda i, j: (0, 0)),
                  pl.BlockSpec((d, bn), lambda i, j: (0, j))],
        out_specs=pl.BlockSpec((bm, bn), lambda i, j: (i, j)),
        compiler_params=pltpu.CompilerParams(
            dimension_semantics=("parallel", "parallel"),
            vmem_limit_bytes=VMEM_LIMIT),
    )(x2d, gamma, w)


# ----------------------------------------------------------------------------
# Tiled matmul with K-axis accumulation (attention output projection)
# ----------------------------------------------------------------------------

def _matmul_kernel(x_ref, w_ref, o_ref, acc_ref):
    @pl.when(pl.program_id(2) == 0)
    def _():
        acc_ref[...] = jnp.zeros_like(acc_ref)

    acc_ref[...] += jnp.dot(x_ref[...], w_ref[...],
                            preferred_element_type=jnp.float32)

    @pl.when(pl.program_id(2) == pl.num_programs(2) - 1)
    def _():
        o_ref[...] = acc_ref[...].astype(o_ref.dtype)


def matmul(x2d, w, out_dtype=jnp.float32):
    m, k = x2d.shape
    n = w.shape[1]
    bm = _tile(m, TILE_M, 8)
    bn = _tile(n, TILE_N, 128)
    bk = _tile(k, TILE_K, 128)
    return pl.pallas_call(
        _matmul_kernel,
        out_shape=jax.ShapeDtypeStruct((m, n), out_dtype),
        grid=(m // bm, n // bn, k // bk),
        in_specs=[pl.BlockSpec((bm, bk), lambda i, j, kk: (i, kk)),
                  pl.BlockSpec((bk, bn), lambda i, j, kk: (kk, j))],
        out_specs=pl.BlockSpec((bm, bn), lambda i, j, kk: (i, j)),
        scratch_shapes=[pltpu.VMEM((bm, bn), jnp.float32)],
        compiler_params=pltpu.CompilerParams(
            dimension_semantics=("parallel", "parallel", "arbitrary"),
            vmem_limit_bytes=VMEM_LIMIT),
    )(x2d, w)


# ----------------------------------------------------------------------------
# Fused RMSNorm + SwiGLU FFN, tiled over the ffn dimension
# ----------------------------------------------------------------------------

def _ffn_kernel(x_ref, g_ref, wg_ref, wu_ref, wd_ref, o_ref, xn_ref, acc_ref,
                *, eps):
    fi = pl.program_id(1)

    @pl.when(fi == 0)
    def _():
        x = x_ref[...].astype(jnp.float32)
        var = jnp.mean(x * x, axis=-1, keepdims=True)
        xn_ref[...] = ((x * jax.lax.rsqrt(var + eps))
                       * g_ref[...].astype(jnp.float32)).astype(xn_ref.dtype)
        acc_ref[...] = jnp.zeros_like(acc_ref)

    xn = xn_ref[...]                                          # (bm, D) bf16
    gate = jnp.dot(xn, wg_ref[...], preferred_element_type=jnp.float32)
    up = jnp.dot(xn, wu_ref[...], preferred_element_type=jnp.float32)
    h = (gate * jax.nn.sigmoid(gate)) * up                    # SwiGLU, f32
    acc_ref[...] += jnp.dot(h.astype(wd_ref.dtype), wd_ref[...],
                            preferred_element_type=jnp.float32)

    @pl.when(fi == pl.num_programs(1) - 1)
    def _():
        o_ref[...] = acc_ref[...].astype(o_ref.dtype)


def rmsnorm_swiglu(x2d, gamma, wg, wu, wd, eps):
    m, d = x2d.shape
    f = wg.shape[1]
    bm = _tile(m, TILE_M, 8)
    bf = _tile(f, TILE_F, 128)
    return pl.pallas_call(
        functools.partial(_ffn_kernel, eps=eps),
        out_shape=jax.ShapeDtypeStruct((m, d), jnp.float32),
        grid=(m // bm, f // bf),
        in_specs=[pl.BlockSpec((bm, d), lambda i, fi: (i, 0)),
                  pl.BlockSpec((1, d), lambda i, fi: (0, 0)),
                  pl.BlockSpec((d, bf), lambda i, fi: (0, fi)),
                  pl.BlockSpec((d, bf), lambda i, fi: (0, fi)),
                  pl.BlockSpec((bf, d), lambda i, fi: (fi, 0))],
        out_specs=pl.BlockSpec((bm, d), lambda i, fi: (i, 0)),
        scratch_shapes=[pltpu.VMEM((bm, d), jnp.bfloat16),
                        pltpu.VMEM((bm, d), jnp.float32)],
        compiler_params=pltpu.CompilerParams(
            dimension_semantics=("parallel", "arbitrary"),
            vmem_limit_bytes=VMEM_LIMIT),
    )(x2d, gamma, wg, wu, wd)


# ----------------------------------------------------------------------------
# Rotary position embedding (tables stay (S, Dh) — no b*h broadcast in HBM)
# ----------------------------------------------------------------------------

def _rope_kernel(x_ref, cos_ref, sin_ref, o_ref):
    x = x_ref[0, 0].astype(jnp.float32)                       # (bs, Dh)
    dh = x.shape[-1]
    d2 = dh // 2
    if dh % 128 == 0:
        # lane-aligned: XLU rotate + sign mask instead of concatenate
        rolled = pltpu.roll(x, shift=d2, axis=1)
        sign = jnp.where(
            jax.lax.broadcasted_iota(jnp.int32, x.shape, 1) < d2, -1.0, 1.0)
        rot = rolled * sign
    else:
        x1 = x[:, :d2]
        x2 = x[:, d2:]
        rot = jnp.concatenate([-x2, x1], axis=-1)
    o_ref[0, 0] = (x * cos_ref[...] + rot * sin_ref[...]).astype(o_ref.dtype)


def apply_rope(x, cos, sin):
    # x: (B, H, S, Dh); cos/sin: (S, Dh) f32
    b, h, s, dh = x.shape
    bs = _tile(s, TILE_S, 8)
    return pl.pallas_call(
        _rope_kernel,
        out_shape=jax.ShapeDtypeStruct((b, h, s, dh), x.dtype),
        grid=(b, h, s // bs),
        in_specs=[pl.BlockSpec((1, 1, bs, dh), lambda bi, hi, si: (bi, hi, si, 0)),
                  pl.BlockSpec((bs, dh), lambda bi, hi, si: (si, 0)),
                  pl.BlockSpec((bs, dh), lambda bi, hi, si: (si, 0))],
        out_specs=pl.BlockSpec((1, 1, bs, dh), lambda bi, hi, si: (bi, hi, si, 0)),
        compiler_params=pltpu.CompilerParams(
            dimension_semantics=("parallel", "parallel", "parallel")),
    )(x, cos, sin)


# ----------------------------------------------------------------------------
# Flash GQA attention with in-kernel causal + sliding-window masking
# ----------------------------------------------------------------------------

def _make_attn_kernel(*, scale, window, offset, bq, bk, has_pad):
    def kernel(q_ref, k_ref, v_ref, *rest):
        if has_pad:
            pad_ref, o_ref, m_sc, l_sc, acc_sc = rest
        else:
            pad_ref = None
            o_ref, m_sc, l_sc, acc_sc = rest

        qt = pl.program_id(3)
        kt = pl.program_id(4)

        @pl.when(kt == 0)
        def _():
            m_sc[...] = jnp.full_like(m_sc, -1e30)
            l_sc[...] = jnp.zeros_like(l_sc)
            acc_sc[...] = jnp.zeros_like(acc_sc)

        # Skip KV tiles entirely outside the causal sliding window of this
        # query tile (compute skip; positions: q = offset + row, k = col).
        q_lo = offset + qt * bq
        q_hi = q_lo + bq - 1
        k_lo = kt * bk
        k_hi = k_lo + bk - 1
        in_range = jnp.logical_and(k_lo <= q_hi, k_hi >= q_lo - window + 1)

        @pl.when(in_range)
        def _():
            q = (q_ref[0, 0, 0].astype(jnp.float32) * scale).astype(k_ref.dtype)
            k = k_ref[0, 0]
            s = jax.lax.dot_general(q, k, (((1,), (1,)), ((), ())),
                                    preferred_element_type=jnp.float32)
            q_pos = (offset + qt * bq
                     + jax.lax.broadcasted_iota(jnp.int32, (bq, bk), 0))
            k_pos = kt * bk + jax.lax.broadcasted_iota(jnp.int32, (bq, bk), 1)
            allowed = jnp.logical_and(k_pos <= q_pos, q_pos - k_pos < window)
            s = jnp.where(allowed, s, -1e30)
            if has_pad:
                s = s + pad_ref[0]

            m_prev = m_sc[...]
            m_new = jnp.maximum(m_prev, jnp.max(s, axis=-1, keepdims=True))
            alpha = jnp.exp(m_prev - m_new)
            p = jnp.where(allowed, jnp.exp(s - m_new), 0.0)
            l_sc[...] = alpha * l_sc[...] + jnp.sum(p, axis=-1, keepdims=True)
            acc_sc[...] = (alpha * acc_sc[...]
                           + jnp.dot(p.astype(v_ref.dtype), v_ref[0, 0],
                                     preferred_element_type=jnp.float32))
            m_sc[...] = m_new

        @pl.when(kt == pl.num_programs(4) - 1)
        def _():
            o_ref[0, 0, 0] = (acc_sc[...]
                              * pl.reciprocal(l_sc[...], approx=True)
                              ).astype(o_ref.dtype)

    return kernel


def flash_attention(q, k, v, *, scale, window, offset, pad_bias=None):
    # q: (B, KVh, G, Sq, Dh);  k, v: (B, KVh, Sk, Dh);  pad_bias: (B, Sq, Sk)|None
    b, kh, g, sq, dh = q.shape
    sk = k.shape[2]
    bq = _tile(sq, TILE_Q, 8)
    bk = _tile(sk, TILE_KV, 8)
    has_pad = pad_bias is not None
    kernel = _make_attn_kernel(scale=scale, window=window, offset=offset,
                               bq=bq, bk=bk, has_pad=has_pad)

    in_specs = [
        pl.BlockSpec((1, 1, 1, bq, dh),
                     lambda bi, ki, gi, qi, kj: (bi, ki, gi, qi, 0)),
        pl.BlockSpec((1, 1, bk, dh),
                     lambda bi, ki, gi, qi, kj: (bi, ki, kj, 0)),
        pl.BlockSpec((1, 1, bk, dh),
                     lambda bi, ki, gi, qi, kj: (bi, ki, kj, 0)),
    ]
    args = [q, k, v]
    if has_pad:
        in_specs.append(pl.BlockSpec((1, bq, bk),
                                     lambda bi, ki, gi, qi, kj: (bi, qi, kj)))
        args.append(pad_bias)

    return pl.pallas_call(
        kernel,
        out_shape=jax.ShapeDtypeStruct((b, kh, g, sq, dh), q.dtype),
        grid=(b, kh, g, sq // bq, sk // bk),
        in_specs=in_specs,
        out_specs=pl.BlockSpec((1, 1, 1, bq, dh),
                               lambda bi, ki, gi, qi, kj: (bi, ki, gi, qi, 0)),
        scratch_shapes=[pltpu.VMEM((bq, 1), jnp.float32),
                        pltpu.VMEM((bq, 1), jnp.float32),
                        pltpu.VMEM((bq, dh), jnp.float32)],
        compiler_params=pltpu.CompilerParams(
            dimension_semantics=("parallel", "parallel", "parallel",
                                 "parallel", "arbitrary"),
            vmem_limit_bytes=VMEM_LIMIT),
    )(*args)


# ----------------------------------------------------------------------------
# Model (glue in plain JAX)
# ----------------------------------------------------------------------------

def rope_tables(positions, head_dim, base):
    inv_freq = 1.0 / (base ** (jnp.arange(0, head_dim, 2, dtype=jnp.float32)
                               / head_dim))
    freqs = positions.astype(jnp.float32)[:, None] * inv_freq[None, :]
    emb = jnp.concatenate([freqs, freqs], axis=-1)            # (S, head_dim)
    return jnp.cos(emb), jnp.sin(emb)


def decoder_block(x, p, cos, sin, cfg, offset, pad_bias=None, past_kv=None):
    b, s, d = x.shape
    h, kh, dh = cfg["num_heads"], cfg["num_kv_heads"], cfg["head_dim"]
    g = h // kh
    x2d = x.reshape(b * s, d)

    # --- self attention (RMSNorm fused into the projections) ---
    q = rmsnorm_linear(x2d, p["attn_norm"], p["wq"], cfg["eps"],
                       out_dtype=jnp.bfloat16)
    k = rmsnorm_linear(x2d, p["attn_norm"], p["wk"], cfg["eps"],
                       out_dtype=jnp.bfloat16)
    v = rmsnorm_linear(x2d, p["attn_norm"], p["wv"], cfg["eps"],
                       out_dtype=jnp.bfloat16)
    q = q.reshape(b, s, h, dh).transpose(0, 2, 1, 3)
    k = k.reshape(b, s, kh, dh).transpose(0, 2, 1, 3)
    v = v.reshape(b, s, kh, dh).transpose(0, 2, 1, 3)
    q = apply_rope(q, cos, sin)
    k = apply_rope(k, cos, sin)
    if past_kv is not None:
        # TODO(synk): replace concat with a pre-allocated cache updated in
        # place via input_output_aliases (O(1) per decode step).
        k = jnp.concatenate([past_kv[0], k], axis=2)
        v = jnp.concatenate([past_kv[1], v], axis=2)

    q5 = q.reshape(b, kh, g, s, dh)                            # GQA grouping
    attn = flash_attention(q5, k, v, scale=1.0 / math.sqrt(dh),
                           window=cfg["sliding_window"], offset=offset,
                           pad_bias=pad_bias)
    attn = attn.reshape(b, h, s, dh).transpose(0, 2, 1, 3).reshape(b * s, h * dh)
    x = x + matmul(attn, p["wo"]).reshape(b, s, d)

    # --- feed forward (RMSNorm fused into the SwiGLU kernel) ---
    x = x + rmsnorm_swiglu(x.reshape(b * s, d), p["ffn_norm"], p["wg"],
                           p["wu"], p["wd"], cfg["eps"]).reshape(b, s, d)
    return x, (k, v)


def mistral_forward(params, input_ids, cfg, padding_mask=None, offset=0,
                    past_key_values=None):
    b, s = input_ids.shape
    d = cfg["hidden_dim"]
    # embedding gather kept in plain JAX (data-dependent gather glue)
    x = params["emb"][input_ids].astype(jnp.float32)

    past_len = 0 if past_key_values is None else past_key_values[0][0].shape[2]
    sk = past_len + s
    # NOTE: like the reference module, key positions are 0..sk-1 and query
    # positions are offset..offset+s-1; masks only line up when offset==past_len.
    pad_bias = None
    if padding_mask is not None:
        pad_bias = jnp.broadcast_to(padding_mask[:, 0], (b, s, sk)).astype(
            jnp.float32)

    q_pos = offset + jnp.arange(s)
    cos, sin = rope_tables(q_pos, cfg["head_dim"], cfg["rope_base"])

    new_caches = []
    for i in range(cfg["num_blocks"]):
        past = past_key_values[i] if past_key_values is not None else None
        x, kv = decoder_block(x, params["blocks"][i], cos, sin, cfg, offset,
                              pad_bias=pad_bias, past_kv=past)
        new_caches.append(kv)

    # final norm fused into the lm_head matmul
    logits = rmsnorm_linear(x.reshape(b * s, d), params["final_norm"],
                            params["lm_head"], cfg["eps"],
                            out_dtype=jnp.float32)
    return logits.reshape(b, s, cfg["vocab_size"]), tuple(new_caches)


# ----------------------------------------------------------------------------
# Deterministic parameter init (bf16 weight streaming; norms in f32)
# ----------------------------------------------------------------------------

def init_params(key, cfg):
    d, v, f = cfg["hidden_dim"], cfg["vocab_size"], cfg["ffn_dim"]
    h, kh, dh = cfg["num_heads"], cfg["num_kv_heads"], cfg["head_dim"]

    def normal(k, shape, scale=0.02):
        return (scale * jax.random.normal(k, shape, dtype=jnp.float32)
                ).astype(jnp.bfloat16)

    keys = jax.random.split(key, cfg["num_blocks"] + 2)
    params = {
        "emb": normal(keys[0], (v, d)),
        "final_norm": jnp.ones((1, d), jnp.float32),
        "blocks": [],
    }
    if cfg["tie_word_embeddings"]:
        # materialized ONCE at init (not per-forward)
        params["lm_head"] = jnp.asarray(params["emb"].T)        # [D, V]
    else:
        params["lm_head"] = normal(keys[1], (d, v))             # nn.Linear(D,V).T
    for i in range(cfg["num_blocks"]):
        bk = jax.random.split(keys[2 + i], 7)
        params["blocks"].append({
            "attn_norm": jnp.ones((1, d), jnp.float32),
            "ffn_norm": jnp.ones((1, d), jnp.float32),
            "wq": normal(bk[0], (d, h * dh)),
            "wk": normal(bk[1], (d, kh * dh)),
            "wv": normal(bk[2], (d, kh * dh)),
            "wo": normal(bk[3], (h * dh, d)),
            "wg": normal(bk[4], (d, f)),
            "wu": normal(bk[5], (d, f)),
            "wd": normal(bk[6], (f, d)),
        })
    return params


# ----------------------------------------------------------------------------

if __name__ == "__main__":
    cfg = dict(
        vocab_size=64,
        hidden_dim=32,
        max_positional_embeddings=64,
        eps=1e-6,
        rope_base=10000.0,
        sliding_window=4,
        ffn_dim=64,
        num_blocks=2,
        num_heads=4,
        num_kv_heads=2,
        tie_word_embeddings=False,
    )
    cfg["head_dim"] = cfg["hidden_dim"] // cfg["num_heads"]

    key = jax.random.PRNGKey(0)
    pkey, ikey = jax.random.split(key)
    params = init_params(pkey, cfg)

    batch, seq = 2, 8
    input_ids = jax.random.randint(ikey, (batch, seq), 0, cfg["vocab_size"])

    logits, kv_cache = mistral_forward(params, input_ids, cfg,
                                       padding_mask=None, offset=0,
                                       past_key_values=None)
    logits = jax.block_until_ready(logits)
    jax.block_until_ready(kv_cache)

    assert logits.shape == (batch, seq, cfg["vocab_size"])
    assert len(kv_cache) == cfg["num_blocks"]
    assert kv_cache[0][0].shape == (batch, cfg["num_kv_heads"], seq,
                                    cfg["head_dim"])
    assert bool(jnp.all(jnp.isfinite(logits)))
    print("KERNEL_OK")
</pallas_src>

<mosaic_0001>
module attributes {stable_mosaic.version = 11 : i64} {
  func.func @_rmsnorm_linear_kernel(%arg0: i32, %arg1: i32, %arg2: memref<16x32xf32, #tpu.memory_space<vmem>>, %arg3: memref<1x32xf32, #tpu.memory_space<vmem>>, %arg4: memref<32x32xbf16, #tpu.memory_space<vmem>>, %arg5: memref<16x32xbf16, #tpu.memory_space<vmem>>) attributes {dimension_semantics = [#tpu.dimension_semantics<parallel>, #tpu.dimension_semantics<parallel>], iteration_bounds = array<i64: 1, 1>, scalar_prefetch = 0 : i64, scratch_operands = 0 : i64, tpu.core_type = #tpu.core_type<tc>, window_params = [{transform_indices = @transform_0, window_bounds = array<i64: 16, 32>}, {pipeline_mode = #tpu.pipeline_mode<synchronous>, transform_indices = @transform_1, window_bounds = array<i64: 1, 32>}, {transform_indices = @transform_2, window_bounds = array<i64: 32, 32>}, {transform_indices = @transform_3, window_bounds = array<i64: 16, 32>}]} {
    %c0 = arith.constant 0 : index
    %c0_0 = arith.constant 0 : index
    %0 = vector.load %arg2[%c0, %c0_0] : memref<16x32xf32, #tpu.memory_space<vmem>>, vector<16x32xf32>
    %1 = arith.mulf %0, %0 : vector<16x32xf32>
    %cst = arith.constant dense<0.000000e+00> : vector<16xf32>
    %2 = vector.multi_reduction <add>, %1, %cst [1] : vector<16x32xf32> to vector<16xf32>
    %3 = vector.shape_cast %2 : vector<16xf32> to vector<16x1xf32>
    %cst_1 = arith.constant 3.200000e+01 : f32
    %4 = vector.broadcast %cst_1 : f32 to vector<16x1xf32>
    %5 = arith.divf %3, %4 : vector<16x1xf32>
    %cst_2 = arith.constant 9.99999997E-7 : f32
    %6 = vector.broadcast %cst_2 : f32 to vector<16x1xf32>
    %7 = arith.addf %5, %6 : vector<16x1xf32>
    %8 = math.rsqrt %7 : vector<16x1xf32>
    %9 = vector.broadcast %8 : vector<16x1xf32> to vector<16x32xf32>
    %10 = arith.mulf %0, %9 : vector<16x32xf32>
    %c0_3 = arith.constant 0 : index
    %c0_4 = arith.constant 0 : index
    %11 = vector.load %arg3[%c0_3, %c0_4] : memref<1x32xf32, #tpu.memory_space<vmem>>, vector<1x32xf32>
    %12 = vector.broadcast %11 : vector<1x32xf32> to vector<16x32xf32>
    %13 = arith.mulf %10, %12 : vector<16x32xf32>
    %14 = arith.truncf %13 : vector<16x32xf32> to vector<16x32xbf16>
    %c0_5 = arith.constant 0 : index
    %c0_6 = arith.constant 0 : index
    %15 = vector.load %arg4[%c0_5, %c0_6] : memref<32x32xbf16, #tpu.memory_space<vmem>>, vector<32x32xbf16>
    %cst_7 = arith.constant dense<0.000000e+00> : vector<16x32xf32>
    %16 = tpu.matmul %14, %15, %cst_7 {dimension_numbers = #tpu.dot_dimension_numbers<[1], [0], [0], [1], [0, 0, 1, 1], [], []>} : vector<16x32xbf16>, vector<32x32xbf16>, vector<16x32xf32> -> vector<16x32xf32>
    %17 = arith.truncf %16 : vector<16x32xf32> to vector<16x32xbf16>
    %c0_8 = arith.constant 0 : index
    %c0_9 = arith.constant 0 : index
    %18 = vector.load %arg5[%c0_8, %c0_9] : memref<16x32xbf16, #tpu.memory_space<vmem>>, vector<16x32xbf16>
    tpu.vector_store %arg5[%c0_8, %c0_9], %17 {strides = array<i32>} : memref<16x32xbf16, #tpu.memory_space<vmem>>, vector<16x32xbf16>,
    return
  }
  func.func @transform_0(%arg0: i32, %arg1: i32) -> (i32, i32) {
    %c0_i32 = arith.constant 0 : i32
    %c0_i32_0 = arith.constant 0 : i32
    return %arg0, %c0_i32 : i32, i32
  }
  func.func @transform_1(%arg0: i32, %arg1: i32) -> (i32, i32) {
    %c0_i32 = arith.constant 0 : i32
    %c0_i32_0 = arith.constant 0 : i32
    %c0_i32_1 = arith.constant 0 : i32
    return %c0_i32, %c0_i32_0 : i32, i32
  }
  func.func @transform_2(%arg0: i32, %arg1: i32) -> (i32, i32) {
    %c0_i32 = arith.constant 0 : i32
    %c0_i32_0 = arith.constant 0 : i32
    return %c0_i32, %arg1 : i32, i32
  }
  func.func @transform_3(%arg0: i32, %arg1: i32) -> (i32, i32) {
    %c0_i32 = arith.constant 0 : i32
    return %arg0, %arg1 : i32, i32
  }
}

</mosaic_0001>

<llo_original>
// kernel: tpu_custom_call.1
$region0: #{tpu_custom_call.1}
  #allocation0 [shape = 'u32[]', space=smem, size = 0x4, offset = 0x4, fixed_abs, tag = 'smem constant byte address 0x4 - core index']
  #allocation1 [shape = 'u32[144,128]{1,0:T(1,128)}', space=vmem, size = 0x12000, scoped, tag = 'internal scratch']
  %s0 = inlined_call_operand.hbm [shape: f32[16,32], index: 0, kind: input, shape index: {}]
  %s1 = inlined_call_operand.hbm [shape: f32[1,32], index: 1, kind: input, shape index: {}]
  %s2 = inlined_call_operand.hbm [shape: bf16[32,32], index: 2, kind: input, shape index: {}]
  %s3 = inlined_call_operand.hbm [shape: bf16[16,32], index: 3, kind: output, shape index: {}]
  %s4 = sld [smem:[#allocation0]]
  $region34: #{tpu_custom_call.1} parent=0
    _
  %s6 = ssub.s32 1, %s4
  %s7 = scalar_select 0, %s6, %s4
  $region1: #{tpu_custom_call.1} parent=0
    #allocation2 [shape = 'u8[8192]{0}', space=vmem, size = 0x2000, scoped, tag = 'input window, operand 0, single buffered']
    #allocation3 [shape = 's32[1]{0}', space=sflag, size = 0x4, scoped, tag = 'scoped memory for tpu_custom_call.1']
    #allocation4 [shape = 's32[1]{0}', space=sflag, size = 0x4, scoped, tag = 'scoped memory for tpu_custom_call.1']
    #allocation5 [shape = 'u8[512]{0}', space=vmem, size = 0x400, scoped, tag = 'input window, operand 1, single buffered']
    #allocation6 [shape = 's32[1]{0}', space=sflag, size = 0x4, scoped, tag = 'scoped memory for tpu_custom_call.1']
    #allocation7 [shape = 'u8[8192]{0}', space=vmem, size = 0x2000, scoped, tag = 'input window, operand 2, single buffered']
    #allocation8 [shape = 'u8[4096]{0}', space=vmem, size = 0x1000, scoped, tag = 'output window, operand 0, single buffered']
    %8 = vsyncpa [#allocation3], 0
    %9 = vsyncpa [#allocation6], 0
    %10 = vsyncpa [#allocation4], 0
    // Predicated region
    $region2: #{tpu_custom_call.1} parent=1 // pred_check
      _
    $region3: #{tpu_custom_call.1} parent=1 // pred_check_branch
      %12 = sbr.rel (0) target = $region5
    $region4: #{tpu_custom_call.1} parent=1 // pred_region
      %s14 = ssub.s32 256, 256
      %15 = vsyncadd [#allocation3], %s14
      %s16 = sshll.u32 [#allocation2], 4
      %s17 = int_to_ptr.vmem [resolvable:$true] %s16
      %22 = dma.hbm_to_vmem [thread:$0]  %s0, 256, %s17, [#allocation3], 128, 128, 8
    $region5: #{tpu_custom_call.1} parent=1 // pred_fallthru
      _
    // Predicated region
    $region6: #{tpu_custom_call.1} parent=1 // pred_check
      _
    $region7: #{tpu_custom_call.1} parent=1 // pred_check_branch
      %24 = sbr.rel (0) target = $region9
    $region8: #{tpu_custom_call.1} parent=1 // pred_region
      %s26 = ssub.s32 16, 16
      %27 = vsyncadd [#allocation6], %s26
      %s29 = sshll.u32 [#allocation5], 4
      %s30 = int_to_ptr.vmem [resolvable:$true] %s29
      %32 = dma.hbm_to_vmem [thread:$0]  %s1, 16, %s30, [#allocation6]
    $region9: #{tpu_custom_call.1} parent=1 // pred_fallthru
      _
    // Predicated region
    $region10: #{tpu_custom_call.1} parent=1 // pred_check
      _
    $region11: #{tpu_custom_call.1} parent=1 // pred_check_branch
      %34 = sbr.rel (0) target = $region13
    $region12: #{tpu_custom_call.1} parent=1 // pred_region
      %s36 = ssub.s32 256, 256
      %37 = vsyncadd [#allocation6], %s36
      %s38 = sshll.u32 [#allocation7], 4
      %s39 = int_to_ptr.vmem [resolvable:$true] %s38
      %44 = dma.hbm_to_vmem [thread:$0]  %s2, 256, %s39, [#allocation6], 64, 64, 4
    $region13: #{tpu_custom_call.1} parent=1 // pred_fallthru
      _
    // Predicated region
    $region14: #{tpu_custom_call.1} parent=1 // pred_check
      _
    $region15: #{tpu_custom_call.1} parent=1 // pred_check_branch
      %46 = sbr.rel (0) target = $region17
    $region16: #{tpu_custom_call.1} parent=1 // pred_region
      %47 = dma.done [#allocation3], 256
    $region17: #{tpu_custom_call.1} parent=1 // pred_fallthru
      _
    // Predicated region
    $region18: #{tpu_custom_call.1} parent=1 // pred_check
      _
    $region19: #{tpu_custom_call.1} parent=1 // pred_check_branch
      %49 = sbr.rel (0) target = $region21
    $region20: #{tpu_custom_call.1} parent=1 // pred_region
      %50 = dma.done [#allocation6], 16
    $region21: #{tpu_custom_call.1} parent=1 // pred_fallthru
      _
    // Predicated region
    $region22: #{tpu_custom_call.1} parent=1 // pred_check
      _
    $region23: #{tpu_custom_call.1} parent=1 // pred_check_branch
      %52 = sbr.rel (0) target = $region25
    $region24: #{tpu_custom_call.1} parent=1 // pred_region
      %53 = dma.done [#allocation6], 256
    $region25: #{tpu_custom_call.1} parent=1 // pred_fallthru
      _
    %v55 = vld [vmem:[#allocation2] sm:$0xff]
    %v56 = vld [vmem:[#allocation2 + $0x8] sm:$0xff]
    %v57 = vmul.f32 %v55, %v55
    %v58 = vmul.f32 %v56, %v56
    %vm59 = vcmask 261120
    %v60 = vsel %vm59, %v57, 0.0
    %61 = vadd.xlane.f32.xlu0 %v60
    %v62 = vpop.xlane.xlu0 %61
    %v63 = vsel %vm59, %v58, 0.0
    %64 = vadd.xlane.f32.xlu0 %v63
    %v65 = vpop.xlane.xlu0 %64
    %v66 = vrcp.pop 32.0
    %v67 = vmul.f32 %v62, %v66
    %v68 = vmul.f32 %v65, %v66
    %v69 = vadd.f32 %v67, 1e-06
    %v70 = vadd.f32 %v68, 1e-06
    %v71 = vrsqrt.pop %v69
    %v72 = vrsqrt.pop %v70
    %v73 = vmul.f32 %v55, %v71
    %v74 = vmul.f32 %v56, %v72
    %v75 = vld [vmem:[#allocation5] sm:$0x1]
    %v77 = vlaneseq
    %v78 = vshrl.u32 %v77, 7
    %v79 = vsub.s32 0, %v78
    %v80 = vrot.slane %v75, %v79
    %v82 = vmul.f32 %v73, %v80
    %v83 = vmul.f32 %v74, %v80
    %v84 = vpack.c.bf16 %v83, %v82
    %v85 = vld [vmem:[#allocation7] sm:$0xf]
    %v86 = vld [vmem:[#allocation7 + $0x4] sm:$0xf]
    %v87 = vld [vmem:[#allocation7 + $0x8] sm:$0xf]
    %v88 = vld [vmem:[#allocation7 + $0xc] sm:$0xf]
    %v93 = vunpack.c.l.b16 %v85
    %v94 = vunpack.c.l.b16 %v86
    %v95 = vunpack.c.l.b16 %v87
    %v96 = vunpack.c.l.b16 %v88
    %v97 = vpack.c.b16 %v94, %v93
    %v98 = vpack.c.b16 %v96, %v95
    %v102 = vsel %vm59, %v84, 0
    %104 = vmatprep.subr.bf16.mxu0 0
    %105 = vmatpush1.bf16.msra.mxu0 %v97
    %106 = vmatprep.subr.bf16.mxu0 0
    %107 = vmatpush1.bf16.msra.mxu0 %v98
    %108 = vmatprep.subr.bf16.mxu0 0
    %109 = vmatpush1.bf16.msra.mxu0 0
    %110 = vmatprep.subr.bf16.mxu0 0
    %111 = vmatpush1.bf16.msra.mxu0 0
    %112 = vmatprep.subr.bf16.mxu0 0
    %113 = vmatpush1.bf16.msra.mxu0 0
    %114 = vmatprep.subr.bf16.mxu0 0
    %115 = vmatpush1.bf16.msra.mxu0 0
    %116 = vmatprep.subr.bf16.mxu0 0
    %117 = vmatpush1.bf16.msra.mxu0 0
    %118 = vmatprep.subr.bf16.mxu0 0
    %119 = vmatpush1.bf16.msra.mxu0 0
    %120 = vmatprep.subr.bf16.mxu0 0
    %121 = vmatpush1.bf16.msra.mxu0 0
    %122 = vmatprep.subr.bf16.mxu0 0
    %123 = vmatpush1.bf16.msra.mxu0 0
    %124 = vmatprep.subr.bf16.mxu0 0
    %125 = vmatpush1.bf16.msra.mxu0 0
    %126 = vmatprep.subr.bf16.mxu0 0
    %127 = vmatpush1.bf16.msra.mxu0 0
    %128 = vmatprep.subr.bf16.mxu0 0
    %129 = vmatpush1.bf16.msra.mxu0 0
    %130 = vmatprep.subr.bf16.mxu0 0
    %131 = vmatpush1.bf16.msra.mxu0 0
    %132 = vmatprep.subr.bf16.mxu0 0
    %133 = vmatpush1.bf16.msra.mxu0 0
    %134 = vmatprep.subr.bf16.mxu0 0
    %135 = vmatpush1.bf16.msra.mxu0 0
    %136 = vmatprep.mubr.bf16.mxu0 0
    %137 = vmatmul.mubr.bf16.gmra.mrb[0].mxu0 %v102
    %v138 = vpop.f32.mrb[0].mxu0
    %v139 = vadd.f32 0.0, %v138
    %v140 = vpop.f32.mrb[0].mxu0
    %v141 = vpop.f32.mrb[0].mxu0
    %v142 = vadd.f32 0.0, %v141
    %v143 = vpop.f32.mrb[0].mxu0
    %144 = vdwg.mxu0
    %v145 = vpack.c.bf16 %v142, %v139
    %v147 = vunpack.c.l.b16 %v145
    %v148 = vunpack.c.h.b16 %v145
    %v149 = vpack.c.b16 %v147, %v147
    %v150 = vpack.c.b16 %v148, %v148
    %vm153 = vcmask 257024
    %154 = vst.msk [vmem:[#allocation8] sm:$0xf] %vm153, %v149
    %155 = vst.msk [vmem:[#allocation8 + $0x4] sm:$0xf] %vm153, %v150
    // Predicated region
    $region26: #{tpu_custom_call.1} parent=1 // pred_check
      _
    $region27: #{tpu_custom_call.1} parent=1 // pred_check_branch
      %157 = sbr.rel (0) target = $region29
    $region28: #{tpu_custom_call.1} parent=1 // pred_region
      %s159 = ssub.s32 128, 128
      %160 = vsyncadd [#allocation4], %s159
      %s161 = sshll.u32 [#allocation8], 4
      %s162 = int_to_ptr.vmem [resolvable:$true] %s161
      %167 = dma.vmem_to_hbm [thread:$0]  %s162, 128, %s3, [#allocation4], 64, 64, 4
    $region29: #{tpu_custom_call.1} parent=1 // pred_fallthru
      _
    // Predicated region
    $region30: #{tpu_custom_call.1} parent=1 // pred_check
      _
    $region31: #{tpu_custom_call.1} parent=1 // pred_check_branch
      %169 = sbr.rel (0) target = $region33
    $region32: #{tpu_custom_call.1} parent=1 // pred_region
      %170 = dma.done [#allocation4], 128
    $region33: #{tpu_custom_call.1} parent=1 // pred_fallthru
      _
    %171 = vsyncpa [#allocation3], 1
    %172 = vsyncpa [#allocation6], 1
    %173 = vsyncpa [#allocation4], 1

</llo_original>
